<compile_context>
chip_gen: v7x
topology: tpu7x:2x2x1
jax: 0.10.0
libtpu: 0.0.40
codegen_flags: <defaults>
</compile_context>

<pallas_src>
import functools

import jax
import jax.numpy as jnp
from jax.experimental import pallas as pl
from jax.experimental.pallas import tpu as pltpu


def _linear_clamp_kernel(x_ref, w_ref, b_ref, o_ref, *, min_value, max_value):
    # Single fused VMEM-resident pass: matmul + bias + clamp_min + clamp_max.
    v = jnp.dot(x_ref[...], w_ref[...], preferred_element_type=jnp.float32)
    v = v + b_ref[...]                  # (B, N) + (1, N) broadcast
    v = jnp.maximum(v, min_value)       # clamp_min (constant-folded)
    v = jnp.minimum(v, max_value)       # clamp_max (constant-folded)
    o_ref[...] = v.astype(o_ref.dtype)


def linear_clamp(x, w_t, b, min_value, max_value):
    """x: (B, K) f32, w_t: (K, N) f32 (pre-transposed weight), b: (N,) f32."""
    B, K = x.shape
    _, N = w_t.shape

    # Bias as a 2-D (1, N) row so the in-kernel broadcast is a simple vreg op.
    b2 = b.reshape(1, N)

    kernel = functools.partial(
        _linear_clamp_kernel,
        min_value=float(min_value),
        max_value=float(max_value),
    )

    # Advisory estimate matching the tensors actually moved (no padding now).
    cost = pl.CostEstimate(
        flops=2 * B * K * N,
        transcendentals=0,
        bytes_accessed=4 * (B * K + K * N + N + B * N),
    )

    out = pl.pallas_call(
        kernel,
        out_shape=jax.ShapeDtypeStruct((B, N), jnp.float32),
        in_specs=[
            pl.BlockSpec(memory_space=pltpu.MemorySpace.VMEM),  # x   (full array)
            pl.BlockSpec(memory_space=pltpu.MemorySpace.VMEM),  # W^T (full array)
            pl.BlockSpec(memory_space=pltpu.MemorySpace.VMEM),  # bias (1, N)
        ],
        out_specs=pl.BlockSpec(memory_space=pltpu.MemorySpace.VMEM),
        cost_estimate=cost,
    )(x, w_t, b2)

    return out


if __name__ == "__main__":
    key = jax.random.PRNGKey(0)
    k_x, k_w, k_b = jax.random.split(key, 3)

    B, K, N = 3, 102, 103
    min_value = 0.0
    max_value = 0.5

    # Input like torch.randn(3, 102)
    x = jax.random.normal(k_x, (B, K), dtype=jnp.float32)

    # Deterministic "Linear(102, 103)" params (PyTorch-style uniform init range)
    bound = 1.0 / (K ** 0.5)
    w = jax.random.uniform(k_w, (N, K), dtype=jnp.float32, minval=-bound, maxval=bound)
    b = jax.random.uniform(k_b, (N,), dtype=jnp.float32, minval=-bound, maxval=bound)
    w_t = w.T  # (K, N) so the kernel computes x @ W^T directly

    out = linear_clamp(x, w_t, b, min_value, max_value)
    jax.block_until_ready(out)

    # Reference check in plain JAX
    ref = jnp.clip(x @ w_t + b[None, :], min_value, max_value)
    assert out.shape == (B, N)
    assert jnp.allclose(out, ref, atol=1e-5, rtol=1e-5)

    print("KERNEL_OK")
</pallas_src>

<mosaic_0001>
module attributes {stable_mosaic.version = 11 : i64} {
  func.func @_linear_clamp_kernel(%arg0: memref<3x102xf32, #tpu.memory_space<vmem>>, %arg1: memref<102x103xf32, #tpu.memory_space<vmem>>, %arg2: memref<1x103xf32, #tpu.memory_space<vmem>>, %arg3: memref<3x103xf32, #tpu.memory_space<vmem>>) attributes {dimension_semantics = [], scalar_prefetch = 0 : i64, scratch_operands = 0 : i64, tpu.core_type = #tpu.core_type<tc>} {
    %c0 = arith.constant 0 : index
    %c0_0 = arith.constant 0 : index
    %0 = vector.load %arg0[%c0, %c0_0] : memref<3x102xf32, #tpu.memory_space<vmem>>, vector<3x102xf32>
    %c0_1 = arith.constant 0 : index
    %c0_2 = arith.constant 0 : index
    %1 = vector.load %arg1[%c0_1, %c0_2] : memref<102x103xf32, #tpu.memory_space<vmem>>, vector<102x103xf32>
    %cst = arith.constant dense<0.000000e+00> : vector<3x103xf32>
    %2 = tpu.matmul %0, %1, %cst {dimension_numbers = #tpu.dot_dimension_numbers<[1], [0], [0], [1], [0, 0, 1, 1], [], []>} : vector<3x102xf32>, vector<102x103xf32>, vector<3x103xf32> -> vector<3x103xf32>
    %c0_3 = arith.constant 0 : index
    %c0_4 = arith.constant 0 : index
    %3 = vector.load %arg2[%c0_3, %c0_4] : memref<1x103xf32, #tpu.memory_space<vmem>>, vector<1x103xf32>
    %4 = vector.broadcast %3 : vector<1x103xf32> to vector<3x103xf32>
    %5 = arith.addf %2, %4 : vector<3x103xf32>
    %cst_5 = arith.constant 0.000000e+00 : f32
    %6 = vector.broadcast %cst_5 : f32 to vector<3x103xf32>
    %7 = arith.maximumf %5, %6 : vector<3x103xf32>
    %cst_6 = arith.constant 5.000000e-01 : f32
    %8 = vector.broadcast %cst_6 : f32 to vector<3x103xf32>
    %9 = arith.minimumf %7, %8 : vector<3x103xf32>
    %c0_7 = arith.constant 0 : index
    %c0_8 = arith.constant 0 : index
    %10 = vector.load %arg3[%c0_7, %c0_8] : memref<3x103xf32, #tpu.memory_space<vmem>>, vector<3x103xf32>
    tpu.vector_store %arg3[%c0_7, %c0_8], %9 {strides = array<i32>} : memref<3x103xf32, #tpu.memory_space<vmem>>, vector<3x103xf32>,
    return
  }
}

</mosaic_0001>

<llo_original>
// kernel: tpu_custom_call.1
$region0: #{tpu_custom_call.1}
  #allocation0 [shape = 'u32[]', space=smem, size = 0x4, offset = 0x4, fixed_abs, tag = 'smem constant byte address 0x4 - core index']
  #allocation1 [shape = 'u32[144,128]{1,0:T(1,128)}', space=vmem, size = 0x12000, scoped, tag = 'internal scratch']
  %s0 = inlined_call_operand.hbm [shape: f32[3,102], index: 0, kind: input, shape index: {}]
  %s1 = inlined_call_operand.hbm [shape: f32[102,103], index: 1, kind: input, shape index: {}]
  %s2 = inlined_call_operand.vmem [shape: f32[1,103], index: 2, kind: input, shape index: {}]
  %s3 = inlined_call_operand.hbm [shape: f32[3,103], index: 3, kind: output, shape index: {}]
  %s4 = sld [smem:[#allocation0]]
  $region30: #{tpu_custom_call.1} parent=0
    _
  %s6 = ssub.s32 1, %s4
  %s7 = scalar_select 0, %s6, %s4
  $region1: #{tpu_custom_call.1} parent=0
    #allocation2 [shape = 'u8[2048]{0}', space=vmem, size = 0x800, scoped, tag = 'input window, operand 0, single buffered']
    #allocation3 [shape = 's32[1]{0}', space=sflag, size = 0x4, scoped, tag = 'scoped memory for tpu_custom_call.1']
    #allocation4 [shape = 's32[1]{0}', space=sflag, size = 0x4, scoped, tag = 'scoped memory for tpu_custom_call.1']
    #allocation5 [shape = 'u8[53248]{0}', space=vmem, size = 0xd000, scoped, tag = 'input window, operand 1, single buffered']
    #allocation6 [shape = 's32[1]{0}', space=sflag, size = 0x4, scoped, tag = 'scoped memory for tpu_custom_call.1']
    #allocation7 [shape = 'u8[2048]{0}', space=vmem, size = 0x800, scoped, tag = 'output window, operand 0, single buffered']
    %8 = vsyncpa [#allocation3], 0
    %9 = vsyncpa [#allocation6], 0
    %10 = vsyncpa [#allocation4], 0
    // Predicated region
    $region2: #{tpu_custom_call.1} parent=1 // pred_check
      _
    $region3: #{tpu_custom_call.1} parent=1 // pred_check_branch
      %12 = sbr.rel (0) target = $region5
    $region4: #{tpu_custom_call.1} parent=1 // pred_region
      %s14 = ssub.s32 64, 64
      %15 = vsyncadd [#allocation3], %s14
      %s17 = sshll.u32 [#allocation2], 4
      %s18 = int_to_ptr.vmem [resolvable:$true] %s17
      %20 = dma.hbm_to_vmem [thread:$0]  %s0, 64, %s18, [#allocation3]
    $region5: #{tpu_custom_call.1} parent=1 // pred_fallthru
      _
    // Predicated region
    $region6: #{tpu_custom_call.1} parent=1 // pred_check
      _
    $region7: #{tpu_custom_call.1} parent=1 // pred_check_branch
      %22 = sbr.rel (0) target = $region9
    $region8: #{tpu_custom_call.1} parent=1 // pred_region
      %s24 = ssub.s32 1664, 1664
      %25 = vsyncadd [#allocation6], %s24
      %s26 = sshll.u32 [#allocation5], 4
      %s27 = int_to_ptr.vmem [resolvable:$true] %s26
      %32 = dma.hbm_to_vmem [thread:$0]  %s1, 1664, %s27, [#allocation6], 128, 128, 8
    $region9: #{tpu_custom_call.1} parent=1 // pred_fallthru
      _
    // Predicated region
    $region10: #{tpu_custom_call.1} parent=1 // pred_check
      _
    $region11: #{tpu_custom_call.1} parent=1 // pred_check_branch
      %34 = sbr.rel (0) target = $region13
    $region12: #{tpu_custom_call.1} parent=1 // pred_region
      _
    $region13: #{tpu_custom_call.1} parent=1 // pred_fallthru
      _
    // Predicated region
    $region14: #{tpu_custom_call.1} parent=1 // pred_check
      _
    $region15: #{tpu_custom_call.1} parent=1 // pred_check_branch
      %36 = sbr.rel (0) target = $region17
    $region16: #{tpu_custom_call.1} parent=1 // pred_region
      %37 = dma.done [#allocation3], 64
    $region17: #{tpu_custom_call.1} parent=1 // pred_fallthru
      _
    // Predicated region
    $region18: #{tpu_custom_call.1} parent=1 // pred_check
      _
    $region19: #{tpu_custom_call.1} parent=1 // pred_check_branch
      %39 = sbr.rel (0) target = $region21
    $region20: #{tpu_custom_call.1} parent=1 // pred_region
      %40 = dma.done [#allocation6], 1664
    $region21: #{tpu_custom_call.1} parent=1 // pred_fallthru
      _
    %v41 = vld [vmem:[#allocation2] sm:$0x7]
    %v42 = vld [vmem:[#allocation5] sm:$0xff]
    %v43 = vld [vmem:[#allocation5 + $0x8] sm:$0xff]
    %v44 = vld [vmem:[#allocation5 + $0x10] sm:$0xff]
    %v45 = vld [vmem:[#allocation5 + $0x18] sm:$0xff]
    %v46 = vld [vmem:[#allocation5 + $0x20] sm:$0xff]
    %v47 = vld [vmem:[#allocation5 + $0x28] sm:$0xff]
    %v48 = vld [vmem:[#allocation5 + $0x30] sm:$0xff]
    %v49 = vld [vmem:[#allocation5 + $0x38] sm:$0xff]
    %v50 = vld [vmem:[#allocation5 + $0x40] sm:$0xff]
    %v51 = vld [vmem:[#allocation5 + $0x48] sm:$0xff]
    %v52 = vld [vmem:[#allocation5 + $0x50] sm:$0xff]
    %v53 = vld [vmem:[#allocation5 + $0x58] sm:$0xff]
    %v54 = vld [vmem:[#allocation5 + $0x60] sm:$0x3f]
    %v55 = vld [vmem:[%s2] sm:$0x1]
    %v57 = vlaneseq
    %v58 = vshrl.u32 %v57, 7
    %v59 = vsub.s32 0, %v58
    %v60 = vrot.slane %v55, %v59
    %vm62 = vcmask 834560
    %v64 = vsel %vm62, %v41, 0
    %vm66 = vcmask 1045504
    %v68 = vsel %vm66, %v54, 0
    %70 = vmatprep.subr.mxu0 0.0
    %71 = vmatpush1.msra.mxu0 %v42
    %72 = vmatprep.subr.mxu0 0.0
    %73 = vmatpush1.msra.mxu0 %v43
    %74 = vmatprep.subr.mxu0 0.0
    %75 = vmatpush1.msra.mxu0 %v44
    %76 = vmatprep.subr.mxu0 0.0
    %77 = vmatpush1.msra.mxu0 %v45
    %78 = vmatprep.subr.mxu0 0.0
    %79 = vmatpush1.msra.mxu0 %v46
    %80 = vmatprep.subr.mxu0 0.0
    %81 = vmatpush1.msra.mxu0 %v47
    %82 = vmatprep.subr.mxu0 0.0
    %83 = vmatpush1.msra.mxu0 %v48
    %84 = vmatprep.subr.mxu0 0.0
    %85 = vmatpush1.msra.mxu0 %v49
    %86 = vmatprep.subr.mxu0 0.0
    %87 = vmatpush1.msra.mxu0 %v50
    %88 = vmatprep.subr.mxu0 0.0
    %89 = vmatpush1.msra.mxu0 %v51
    %90 = vmatprep.subr.mxu0 0.0
    %91 = vmatpush1.msra.mxu0 %v52
    %92 = vmatprep.subr.mxu0 0.0
    %93 = vmatpush1.msra.mxu0 %v53
    %94 = vmatprep.subr.mxu0 0.0
    %95 = vmatpush1.msra.mxu0 %v68
    %96 = vmatprep.subr.mxu0 0.0
    %97 = vmatpush1.msra.mxu0 0.0
    %98 = vmatprep.subr.mxu0 0.0
    %99 = vmatpush1.msra.mxu0 0.0
    %100 = vmatprep.subr.mxu0 0.0
    %101 = vmatpush1.msra.mxu0 0.0
    %102 = vmatprep.subr.mxu0 0.0
    %103 = vmatpush1.msra.mxu0 0.0
    %104 = vmatprep.subr.mxu0 0.0
    %105 = vmatpush1.msra.mxu0 0.0
    %106 = vmatprep.subr.mxu0 0.0
    %107 = vmatpush1.msra.mxu0 0.0
    %108 = vmatprep.subr.mxu0 0.0
    %109 = vmatpush1.msra.mxu0 0.0
    %110 = vmatprep.subr.mxu0 0.0
    %111 = vmatpush1.msra.mxu0 0.0
    %112 = vmatprep.subr.mxu0 0.0
    %113 = vmatpush1.msra.mxu0 0.0
    %114 = vmatprep.subr.mxu0 0.0
    %115 = vmatpush1.msra.mxu0 0.0
    %116 = vmatprep.subr.mxu0 0.0
    %117 = vmatpush1.msra.mxu0 0.0
    %118 = vmatprep.subr.mxu0 0.0
    %119 = vmatpush1.msra.mxu0 0.0
    %120 = vmatprep.subr.mxu0 0.0
    %121 = vmatpush1.msra.mxu0 0.0
    %122 = vmatprep.subr.mxu0 0.0
    %123 = vmatpush1.msra.mxu0 0.0
    %124 = vmatprep.subr.mxu0 0.0
    %125 = vmatpush1.msra.mxu0 0.0
    %126 = vmatprep.subr.mxu0 0.0
    %127 = vmatpush1.msra.mxu0 0.0
    %128 = vmatprep.subr.mxu0 0.0
    %129 = vmatpush1.msra.mxu0 0.0
    %130 = vmatprep.subr.mxu0 0.0
    %131 = vmatpush1.msra.mxu0 0.0
    %132 = vmatprep.subr.mxu0 0.0
    %133 = vmatpush1.msra.mxu0 0.0
    %134 = vmatprep.mubr.f32.mxu0 0.0
    %135 = vmatmul.mubr.f32.gmra.mrb[0].mxu0 %v64
    %v136 = vpop.f32.mrb[0].mxu0
    %v137 = vadd.f32 %v60, %v136
    %v138 = vpop.f32.mrb[0].mxu0
    %139 = vdwg.mxu0
    %v140 = vmax.f32 %v137, 0.0
    %v141 = vmin.f32 %v140, 0.5
    %vm142 = vcmask 837632
    %143 = vst.msk [vmem:[#allocation7] sm:$0x7] %vm142, %v141
    // Predicated region
    $region22: #{tpu_custom_call.1} parent=1 // pred_check
      _
    $region23: #{tpu_custom_call.1} parent=1 // pred_check_branch
      %145 = sbr.rel (0) target = $region25
    $region24: #{tpu_custom_call.1} parent=1 // pred_region
      %s147 = ssub.s32 64, 64
      %148 = vsyncadd [#allocation4], %s147
      %s150 = sshll.u32 [#allocation7], 4
      %s151 = int_to_ptr.vmem [resolvable:$true] %s150
      %153 = dma.vmem_to_hbm [thread:$0]  %s151, 64, %s3, [#allocation4]
    $region25: #{tpu_custom_call.1} parent=1 // pred_fallthru
      _
    // Predicated region
    $region26: #{tpu_custom_call.1} parent=1 // pred_check
      _
    $region27: #{tpu_custom_call.1} parent=1 // pred_check_branch
      %155 = sbr.rel (0) target = $region29
    $region28: #{tpu_custom_call.1} parent=1 // pred_region
      %156 = dma.done [#allocation4], 64
    $region29: #{tpu_custom_call.1} parent=1 // pred_fallthru
      _
    %157 = vsyncpa [#allocation3], 1
    %158 = vsyncpa [#allocation6], 1
    %159 = vsyncpa [#allocation4], 1

</llo_original>
